<compile_context>
chip_gen: v7x
topology: tpu7x:2x2x1
jax: 0.10.0
libtpu: 0.0.40
codegen_flags: <defaults>
</compile_context>

<pallas_src>
import jax
import jax.numpy as jnp
from jax import lax
from jax.experimental import pallas as pl
from jax.experimental.pallas import tpu as pltpu


def _round_up(x, m):
    return (x + m - 1) // m * m


def _make_recurrence_kernel(time_block):
    """Kernel running `time_block` recurrence steps per grid iteration."""

    def kernel(gamma_ref,        # SMEM (1,) f32
               extra_ref,        # VMEM (Tb, B_p, lat_p)  streamed: x@w_inp + bias + noise
               h0_ref,           # VMEM (B_p, lat_p)      resident
               wrec_ref,         # VMEM (lat_p, lat_p)    resident
               hseq_ref,         # VMEM (Tb, B_p, lat_p)  streamed output
               h_scr):           # VMEM (B_p, lat_p) f32  hidden carry
        tb = pl.program_id(0)

        # Load the initial hidden state into the carry on the first block.
        @pl.when(tb == 0)
        def _():
            h_scr[...] = h0_ref[...].astype(jnp.float32)

        gamma = gamma_ref[0]
        w_rec = wrec_ref[...]            # hoisted load, reused by all inner steps

        def step(s, h):
            # rec = h_{t-1} @ w_rec  (MXU, f32 accumulate)
            rec = jnp.dot(h, w_rec, preferred_element_type=jnp.float32)
            # pre-activation: rec + (x@w_inp + bias + noise), precomputed & streamed
            pre = rec + extra_ref[s]
            h_new = (1.0 - gamma) * rec + gamma * jnp.tanh(pre)
            hseq_ref[s] = h_new.astype(hseq_ref.dtype)
            return h_new

        h_final = lax.fori_loop(0, time_block, step, h_scr[...], unroll=True)
        h_scr[...] = h_final

    return kernel


def driscoll_rnn_forward_seq(x_seq, h0, noise_seq,
                             w_rec, w_inp, bias, w_out, b_out,
                             *, gamma=0.2, time_block=32):
    """Run T DriscollRNN steps; serial recurrence in one Pallas kernel.

    x_seq:     (T, B, input_size)
    h0:        (B, latent)
    noise_seq: (T, B, latent)   -- already scaled by noise_level
    w_rec:     (latent, latent)        (= recW.weight.T)
    w_inp:     (input_size, latent)    (= inpW.weight.T)
    bias:      (latent,) or (1, latent)
    w_out:     (latent, output_size)   (= readout.weight.T)
    b_out:     (output_size,) or (1, output_size)
    Returns (outputs (T, B, output_size), hiddens (T, B, latent)).
    """
    T, B, input_size = x_seq.shape
    latent = h0.shape[1]
    dtype = h0.dtype
    f32 = jnp.float32

    # Sublane/lane-aligned padded shapes.
    B_p = max(_round_up(B, 8), 8)
    lat_p = _round_up(latent, 128)

    # Time blocking: Tb inner steps per grid iteration.
    Tb = max(1, min(time_block, T))
    T_p = _round_up(T, Tb)

    # ---- Hoisted, fully parallel precompute (one big XLA matmul over T*B) ----
    #   extra_t = x_t @ w_inp + bias + noise_t
    extra = (jnp.einsum('tbi,il->tbl', x_seq.astype(f32), w_inp.astype(f32))
             + jnp.reshape(bias, (1, 1, -1)).astype(f32)
             + noise_seq.astype(f32))

    extra_p = jnp.zeros((T_p, B_p, lat_p), f32).at[:T, :B, :latent].set(extra)
    h0_p = jnp.zeros((B_p, lat_p), f32).at[:B, :latent].set(h0.astype(f32))
    wrec_p = jnp.zeros((lat_p, lat_p), f32).at[:latent, :latent].set(w_rec.astype(f32))
    gamma_arr = jnp.asarray([gamma], dtype=f32)

    kernel = _make_recurrence_kernel(Tb)

    grid_spec = pltpu.PrefetchScalarGridSpec(
        num_scalar_prefetch=0,
        grid=(T_p // Tb,),
        in_specs=[
            pl.BlockSpec(memory_space=pltpu.MemorySpace.SMEM),        # gamma scalar
            pl.BlockSpec((Tb, B_p, lat_p), lambda t: (t, 0, 0)),      # extra (streamed)
            pl.BlockSpec((B_p, lat_p), lambda t: (0, 0)),             # h0    (resident)
            pl.BlockSpec((lat_p, lat_p), lambda t: (0, 0)),           # w_rec (resident)
        ],
        out_specs=pl.BlockSpec((Tb, B_p, lat_p), lambda t: (t, 0, 0)),  # hidden slab
        scratch_shapes=[pltpu.VMEM((B_p, lat_p), jnp.float32)],         # hidden carry
    )

    h_pad = pl.pallas_call(
        kernel,
        grid_spec=grid_spec,
        out_shape=jax.ShapeDtypeStruct((T_p, B_p, lat_p), dtype),
        compiler_params=pltpu.CompilerParams(
            dimension_semantics=("arbitrary",)),   # sequential: hidden carry across blocks
    )(gamma_arr, extra_p, h0_p, wrec_p)

    h_seq = h_pad[:T, :B, :latent]

    # ---- Hoisted readout (depends only on h_{t-1}, no recurrence) ----
    h_prev = jnp.concatenate([h0.astype(f32)[None], h_seq[:-1].astype(f32)], axis=0)
    out_seq = (jnp.einsum('tbl,lo->tbo', h_prev, w_out.astype(f32))
               + jnp.reshape(b_out, (1, 1, -1)).astype(f32)).astype(dtype)

    return out_seq, h_seq


def driscoll_rnn_forward(inputs, hidden, noise,
                         w_rec, w_inp, bias, w_out, b_out, *, gamma=0.2):
    """Single step (matches the module's forward signature): T = 1 of the fused path."""
    out_seq, h_seq = driscoll_rnn_forward_seq(
        inputs[None], hidden, noise[None],
        w_rec, w_inp, bias, w_out, b_out, gamma=gamma)
    return out_seq[0], h_seq[0]


if __name__ == "__main__":
    # Small shapes consistent with the module's forward.
    T = 8
    B = 4
    input_size = 8
    latent_size = 32
    output_size = 8
    noise_level = 0.05
    gamma = 0.2

    key = jax.random.PRNGKey(0)
    k_x, k_h, k_noise, k_wr, k_wi, k_b, k_wo, k_bo = jax.random.split(key, 8)

    x_seq = jax.random.normal(k_x, (T, B, input_size), dtype=jnp.float32)
    h0 = jax.random.normal(k_h, (B, latent_size), dtype=jnp.float32)
    # noise = randn_like(hidden) * noise_level  (deterministic via PRNGKey, per step)
    noise_seq = jax.random.normal(k_noise, (T, B, latent_size), jnp.float32) * noise_level

    # Deterministic parameter init (nn.Linear-style scale), stored transposed.
    s_lat = 1.0 / latent_size ** 0.5
    s_in = 1.0 / input_size ** 0.5
    w_rec = jax.random.uniform(k_wr, (latent_size, latent_size), jnp.float32, -s_lat, s_lat)
    w_inp = jax.random.uniform(k_wi, (input_size, latent_size), jnp.float32, -s_in, s_in)
    bias = jax.random.normal(k_b, (latent_size,), jnp.float32) * 0.1
    w_out = jax.random.uniform(k_wo, (latent_size, output_size), jnp.float32, -s_lat, s_lat)
    b_out = jax.random.uniform(k_bo, (output_size,), jnp.float32, -s_lat, s_lat)

    # Fused multi-step path (Pallas recurrence + hoisted projections).
    out_seq, h_seq = driscoll_rnn_forward_seq(
        x_seq, h0, noise_seq, w_rec, w_inp, bias, w_out, b_out, gamma=gamma)
    jax.block_until_ready((out_seq, h_seq))

    # Pure-JAX reference (step-by-step, identical to the PyTorch forward).
    h = h0
    outs_ref, hs_ref = [], []
    for t in range(T):
        out_t = h @ w_out + b_out[None, :]
        rec = h @ w_rec
        inp = x_seq[t] @ w_inp
        h = (1 - gamma) * rec + gamma * jnp.tanh(rec + inp + bias[None, :] + noise_seq[t])
        outs_ref.append(out_t)
        hs_ref.append(h)
    out_ref = jnp.stack(outs_ref)
    h_ref = jnp.stack(hs_ref)

    assert jnp.allclose(out_seq, out_ref, atol=1e-4, rtol=1e-4), \
        float(jnp.max(jnp.abs(out_seq - out_ref)))
    assert jnp.allclose(h_seq, h_ref, atol=1e-4, rtol=1e-4), \
        float(jnp.max(jnp.abs(h_seq - h_ref)))

    # Single-step path (module's exact forward interface).
    out1, h1 = driscoll_rnn_forward(x_seq[0], h0, noise_seq[0],
                                    w_rec, w_inp, bias, w_out, b_out, gamma=gamma)
    jax.block_until_ready((out1, h1))
    assert jnp.allclose(out1, out_ref[0], atol=1e-4, rtol=1e-4)
    assert jnp.allclose(h1, h_ref[0], atol=1e-4, rtol=1e-4)

    print("KERNEL_OK")
</pallas_src>

<mosaic_0001>
module attributes {stable_mosaic.version = 11 : i64} {
  func.func @kernel(%arg0: i32, %arg1: memref<1xf32, #tpu.memory_space<smem>>, %arg2: memref<8x8x128xf32, #tpu.memory_space<vmem>>, %arg3: memref<8x128xf32, #tpu.memory_space<vmem>>, %arg4: memref<128x128xf32, #tpu.memory_space<vmem>>, %arg5: memref<8x8x128xf32, #tpu.memory_space<vmem>>, %arg6: memref<8x128xf32, #tpu.memory_space<vmem>>) attributes {dimension_semantics = [#tpu.dimension_semantics<arbitrary>], iteration_bounds = array<i64: 1>, scalar_prefetch = 0 : i64, scratch_operands = 1 : i64, tpu.core_type = #tpu.core_type<tc>, window_params = [{transform_indices = @transform_0, window_bounds = array<i64: 1>}, {transform_indices = @transform_1, window_bounds = array<i64: 8, 8, 128>}, {pipeline_mode = #tpu.pipeline_mode<synchronous>, transform_indices = @transform_2, window_bounds = array<i64: 8, 128>}, {pipeline_mode = #tpu.pipeline_mode<synchronous>, transform_indices = @transform_3, window_bounds = array<i64: 128, 128>}, {transform_indices = @transform_4, window_bounds = array<i64: 8, 8, 128>}]} {
    %c0_i32 = arith.constant 0 : i32
    %0 = arith.cmpi eq, %arg0, %c0_i32 : i32
    %1 = arith.extui %0 : i1 to i32
    %c0_i32_0 = arith.constant 0 : i32
    %2 = arith.cmpi ne, %1, %c0_i32_0 : i32
    scf.if %2 {
      %c0_55 = arith.constant 0 : index
      %c0_56 = arith.constant 0 : index
      %135 = vector.load %arg3[%c0_55, %c0_56] : memref<8x128xf32, #tpu.memory_space<vmem>>, vector<8x128xf32>
      %c0_57 = arith.constant 0 : index
      %c0_58 = arith.constant 0 : index
      %136 = vector.load %arg6[%c0_57, %c0_58] : memref<8x128xf32, #tpu.memory_space<vmem>>, vector<8x128xf32>
      tpu.vector_store %arg6[%c0_57, %c0_58], %135 {strides = array<i32>} : memref<8x128xf32, #tpu.memory_space<vmem>>, vector<8x128xf32>,
    } else {
    }
    %c0 = arith.constant 0 : index
    %3 = memref.load %arg1[%c0] : memref<1xf32, #tpu.memory_space<smem>>
    %c0_1 = arith.constant 0 : index
    %c0_2 = arith.constant 0 : index
    %4 = vector.load %arg4[%c0_1, %c0_2] : memref<128x128xf32, #tpu.memory_space<vmem>>, vector<128x128xf32>
    %c0_3 = arith.constant 0 : index
    %c0_4 = arith.constant 0 : index
    %5 = vector.load %arg6[%c0_3, %c0_4] : memref<8x128xf32, #tpu.memory_space<vmem>>, vector<8x128xf32>
    %c0_i32_5 = arith.constant 0 : i32
    %cst = arith.constant dense<0.000000e+00> : vector<8x128xf32>
    %6 = tpu.matmul %5, %4, %cst {dimension_numbers = #tpu.dot_dimension_numbers<[1], [0], [0], [1], [0, 0, 1, 1], [], []>} : vector<8x128xf32>, vector<128x128xf32>, vector<8x128xf32> -> vector<8x128xf32>
    %7 = arith.index_cast %c0_i32_5 : i32 to index
    %c0_6 = arith.constant 0 : index
    %c0_7 = arith.constant 0 : index
    %8 = vector.load %arg2[%7, %c0_6, %c0_7] : memref<8x8x128xf32, #tpu.memory_space<vmem>>, vector<1x8x128xf32>
    %9 = vector.shape_cast %8 : vector<1x8x128xf32> to vector<8x128xf32>
    %10 = arith.addf %6, %9 : vector<8x128xf32>
    %cst_8 = arith.constant 1.000000e+00 : f32
    %11 = arith.subf %cst_8, %3 : f32
    %12 = vector.broadcast %11 : f32 to vector<8x128xf32>
    %13 = arith.mulf %12, %6 : vector<8x128xf32>
    %14 = math.tanh %10 : vector<8x128xf32>
    %15 = vector.broadcast %3 : f32 to vector<8x128xf32>
    %16 = arith.mulf %15, %14 : vector<8x128xf32>
    %17 = arith.addf %13, %16 : vector<8x128xf32>
    %18 = arith.index_cast %c0_i32_5 : i32 to index
    %c0_9 = arith.constant 0 : index
    %c0_10 = arith.constant 0 : index
    %19 = vector.load %arg5[%18, %c0_9, %c0_10] : memref<8x8x128xf32, #tpu.memory_space<vmem>>, vector<1x8x128xf32>
    %20 = vector.shape_cast %19 : vector<1x8x128xf32> to vector<8x128xf32>
    %21 = vector.shape_cast %17 : vector<8x128xf32> to vector<1x8x128xf32>
    tpu.vector_store %arg5[%18, %c0_9, %c0_10], %21 {strides = array<i32>} : memref<8x8x128xf32, #tpu.memory_space<vmem>>, vector<1x8x128xf32>,
    %c1_i32 = arith.constant 1 : i32
    %cst_11 = arith.constant dense<0.000000e+00> : vector<8x128xf32>
    %22 = tpu.matmul %17, %4, %cst_11 {dimension_numbers = #tpu.dot_dimension_numbers<[1], [0], [0], [1], [0, 0, 1, 1], [], []>} : vector<8x128xf32>, vector<128x128xf32>, vector<8x128xf32> -> vector<8x128xf32>
    %23 = arith.index_cast %c1_i32 : i32 to index
    %c0_12 = arith.constant 0 : index
    %c0_13 = arith.constant 0 : index
    %24 = vector.load %arg2[%23, %c0_12, %c0_13] : memref<8x8x128xf32, #tpu.memory_space<vmem>>, vector<1x8x128xf32>
    %25 = vector.shape_cast %24 : vector<1x8x128xf32> to vector<8x128xf32>
    %26 = arith.addf %22, %25 : vector<8x128xf32>
    %cst_14 = arith.constant 1.000000e+00 : f32
    %27 = arith.subf %cst_14, %3 : f32
    %28 = vector.broadcast %27 : f32 to vector<8x128xf32>
    %29 = arith.mulf %28, %22 : vector<8x128xf32>
    %30 = math.tanh %26 : vector<8x128xf32>
    %31 = vector.broadcast %3 : f32 to vector<8x128xf32>
    %32 = arith.mulf %31, %30 : vector<8x128xf32>
    %33 = arith.addf %29, %32 : vector<8x128xf32>
    %34 = arith.index_cast %c1_i32 : i32 to index
    %c0_15 = arith.constant 0 : index
    %c0_16 = arith.constant 0 : index
    %35 = vector.load %arg5[%34, %c0_15, %c0_16] : memref<8x8x128xf32, #tpu.memory_space<vmem>>, vector<1x8x128xf32>
    %36 = vector.shape_cast %35 : vector<1x8x128xf32> to vector<8x128xf32>
    %37 = vector.shape_cast %33 : vector<8x128xf32> to vector<1x8x128xf32>
    tpu.vector_store %arg5[%34, %c0_15, %c0_16], %37 {strides = array<i32>} : memref<8x8x128xf32, #tpu.memory_space<vmem>>, vector<1x8x128xf32>,
    %c2_i32 = arith.constant 2 : i32
    %cst_17 = arith.constant dense<0.000000e+00> : vector<8x128xf32>
    %38 = tpu.matmul %33, %4, %cst_17 {dimension_numbers = #tpu.dot_dimension_numbers<[1], [0], [0], [1], [0, 0, 1, 1], [], []>} : vector<8x128xf32>, vector<128x128xf32>, vector<8x128xf32> -> vector<8x128xf32>
    %39 = arith.index_cast %c2_i32 : i32 to index
    %c0_18 = arith.constant 0 : index
    %c0_19 = arith.constant 0 : index
    %40 = vector.load %arg2[%39, %c0_18, %c0_19] : memref<8x8x128xf32, #tpu.memory_space<vmem>>, vector<1x8x128xf32>
    %41 = vector.shape_cast %40 : vector<1x8x128xf32> to vector<8x128xf32>
    %42 = arith.addf %38, %41 : vector<8x128xf32>
    %cst_20 = arith.constant 1.000000e+00 : f32
    %43 = arith.subf %cst_20, %3 : f32
    %44 = vector.broadcast %43 : f32 to vector<8x128xf32>
    %45 = arith.mulf %44, %38 : vector<8x128xf32>
    %46 = math.tanh %42 : vector<8x128xf32>
    %47 = vector.broadcast %3 : f32 to vector<8x128xf32>
    %48 = arith.mulf %47, %46 : vector<8x128xf32>
    %49 = arith.addf %45, %48 : vector<8x128xf32>
    %50 = arith.index_cast %c2_i32 : i32 to index
    %c0_21 = arith.constant 0 : index
    %c0_22 = arith.constant 0 : index
    %51 = vector.load %arg5[%50, %c0_21, %c0_22] : memref<8x8x128xf32, #tpu.memory_space<vmem>>, vector<1x8x128xf32>
    %52 = vector.shape_cast %51 : vector<1x8x128xf32> to vector<8x128xf32>
    %53 = vector.shape_cast %49 : vector<8x128xf32> to vector<1x8x128xf32>
    tpu.vector_store %arg5[%50, %c0_21, %c0_22], %53 {strides = array<i32>} : memref<8x8x128xf32, #tpu.memory_space<vmem>>, vector<1x8x128xf32>,
    %c3_i32 = arith.constant 3 : i32
    %cst_23 = arith.constant dense<0.000000e+00> : vector<8x128xf32>
    %54 = tpu.matmul %49, %4, %cst_23 {dimension_numbers = #tpu.dot_dimension_numbers<[1], [0], [0], [1], [0, 0, 1, 1], [], []>} : vector<8x128xf32>, vector<128x128xf32>, vector<8x128xf32> -> vector<8x128xf32>
    %55 = arith.index_cast %c3_i32 : i32 to index
    %c0_24 = arith.constant 0 : index
    %c0_25 = arith.constant 0 : index
    %56 = vector.load %arg2[%55, %c0_24, %c0_25] : memref<8x8x128xf32, #tpu.memory_space<vmem>>, vector<1x8x128xf32>
    %57 = vector.shape_cast %56 : vector<1x8x128xf32> to vector<8x128xf32>
    %58 = arith.addf %54, %57 : vector<8x128xf32>
    %cst_26 = arith.constant 1.000000e+00 : f32
    %59 = arith.subf %cst_26, %3 : f32
    %60 = vector.broadcast %59 : f32 to vector<8x128xf32>
    %61 = arith.mulf %60, %54 : vector<8x128xf32>
    %62 = math.tanh %58 : vector<8x128xf32>
    %63 = vector.broadcast %3 : f32 to vector<8x128xf32>
    %64 = arith.mulf %63, %62 : vector<8x128xf32>
    %65 = arith.addf %61, %64 : vector<8x128xf32>
    %66 = arith.index_cast %c3_i32 : i32 to index
    %c0_27 = arith.constant 0 : index
    %c0_28 = arith.constant 0 : index
    %67 = vector.load %arg5[%66, %c0_27, %c0_28] : memref<8x8x128xf32, #tpu.memory_space<vmem>>, vector<1x8x128xf32>
    %68 = vector.shape_cast %67 : vector<1x8x128xf32> to vector<8x128xf32>
    %69 = vector.shape_cast %65 : vector<8x128xf32> to vector<1x8x128xf32>
    tpu.vector_store %arg5[%66, %c0_27, %c0_28], %69 {strides = array<i32>} : memref<8x8x128xf32, #tpu.memory_space<vmem>>, vector<1x8x128xf32>,
    %c4_i32 = arith.constant 4 : i32
    %cst_29 = arith.constant dense<0.000000e+00> : vector<8x128xf32>
    %70 = tpu.matmul %65, %4, %cst_29 {dimension_numbers = #tpu.dot_dimension_numbers<[1], [0], [0], [1], [0, 0, 1, 1], [], []>} : vector<8x128xf32>, vector<128x128xf32>, vector<8x128xf32> -> vector<8x128xf32>
    %71 = arith.index_cast %c4_i32 : i32 to index
    %c0_30 = arith.constant 0 : index
    %c0_31 = arith.constant 0 : index
    %72 = vector.load %arg2[%71, %c0_30, %c0_31] : memref<8x8x128xf32, #tpu.memory_space<vmem>>, vector<1x8x128xf32>
    %73 = vector.shape_cast %72 : vector<1x8x128xf32> to vector<8x128xf32>
    %74 = arith.addf %70, %73 : vector<8x128xf32>
    %cst_32 = arith.constant 1.000000e+00 : f32
    %75 = arith.subf %cst_32, %3 : f32
    %76 = vector.broadcast %75 : f32 to vector<8x128xf32>
    %77 = arith.mulf %76, %70 : vector<8x128xf32>
    %78 = math.tanh %74 : vector<8x128xf32>
    %79 = vector.broadcast %3 : f32 to vector<8x128xf32>
    %80 = arith.mulf %79, %78 : vector<8x128xf32>
    %81 = arith.addf %77, %80 : vector<8x128xf32>
    %82 = arith.index_cast %c4_i32 : i32 to index
    %c0_33 = arith.constant 0 : index
    %c0_34 = arith.constant 0 : index
    %83 = vector.load %arg5[%82, %c0_33, %c0_34] : memref<8x8x128xf32, #tpu.memory_space<vmem>>, vector<1x8x128xf32>
    %84 = vector.shape_cast %83 : vector<1x8x128xf32> to vector<8x128xf32>
    %85 = vector.shape_cast %81 : vector<8x128xf32> to vector<1x8x128xf32>
    tpu.vector_store %arg5[%82, %c0_33, %c0_34], %85 {strides = array<i32>} : memref<8x8x128xf32, #tpu.memory_space<vmem>>, vector<1x8x128xf32>,
    %c5_i32 = arith.constant 5 : i32
    %cst_35 = arith.constant dense<0.000000e+00> : vector<8x128xf32>
    %86 = tpu.matmul %81, %4, %cst_35 {dimension_numbers = #tpu.dot_dimension_numbers<[1], [0], [0], [1], [0, 0, 1, 1], [], []>} : vector<8x128xf32>, vector<128x128xf32>, vector<8x128xf32> -> vector<8x128xf32>
    %87 = arith.index_cast %c5_i32 : i32 to index
    %c0_36 = arith.constant 0 : index
    %c0_37 = arith.constant 0 : index
    %88 = vector.load %arg2[%87, %c0_36, %c0_37] : memref<8x8x128xf32, #tpu.memory_space<vmem>>, vector<1x8x128xf32>
    %89 = vector.shape_cast %88 : vector<1x8x128xf32> to vector<8x128xf32>
    %90 = arith.addf %86, %89 : vector<8x128xf32>
    %cst_38 = arith.constant 1.000000e+00 : f32
    %91 = arith.subf %cst_38, %3 : f32
    %92 = vector.broadcast %91 : f32 to vector<8x128xf32>
    %93 = arith.mulf %92, %86 : vector<8x128xf32>
    %94 = math.tanh %90 : vector<8x128xf32>
    %95 = vector.broadcast %3 : f32 to vector<8x128xf32>
    %96 = arith.mulf %95, %94 : vector<8x128xf32>
    %97 = arith.addf %93, %96 : vector<8x128xf32>
    %98 = arith.index_cast %c5_i32 : i32 to index
    %c0_39 = arith.constant 0 : index
    %c0_40 = arith.constant 0 : index
    %99 = vector.load %arg5[%98, %c0_39, %c0_40] : memref<8x8x128xf32, #tpu.memory_space<vmem>>, vector<1x8x128xf32>
    %100 = vector.shape_cast %99 : vector<1x8x128xf32> to vector<8x128xf32>
    %101 = vector.shape_cast %97 : vector<8x128xf32> to vector<1x8x128xf32>
    tpu.vector_store %arg5[%98, %c0_39, %c0_40], %101 {strides = array<i32>} : memref<8x8x128xf32, #tpu.memory_space<vmem>>, vector<1x8x128xf32>,
    %c6_i32 = arith.constant 6 : i32
    %cst_41 = arith.constant dense<0.000000e+00> : vector<8x128xf32>
    %102 = tpu.matmul %97, %4, %cst_41 {dimension_numbers = #tpu.dot_dimension_numbers<[1], [0], [0], [1], [0, 0, 1, 1], [], []>} : vector<8x128xf32>, vector<128x128xf32>, vector<8x128xf32> -> vector<8x128xf32>
    %103 = arith.index_cast %c6_i32 : i32 to index
    %c0_42 = arith.constant 0 : index
    %c0_43 = arith.constant 0 : index
    %104 = vector.load %arg2[%103, %c0_42, %c0_43] : memref<8x8x128xf32, #tpu.memory_space<vmem>>, vector<1x8x128xf32>
    %105 = vector.shape_cast %104 : vector<1x8x128xf32> to vector<8x128xf32>
    %106 = arith.addf %102, %105 : vector<8x128xf32>
    %cst_44 = arith.constant 1.000000e+00 : f32
    %107 = arith.subf %cst_44, %3 : f32
    %108 = vector.broadcast %107 : f32 to vector<8x128xf32>
    %109 = arith.mulf %108, %102 : vector<8x128xf32>
    %110 = math.tanh %106 : vector<8x128xf32>
    %111 = vector.broadcast %3 : f32 to vector<8x128xf32>
    %112 = arith.mulf %111, %110 : vector<8x128xf32>
    %113 = arith.addf %109, %112 : vector<8x128xf32>
    %114 = arith.index_cast %c6_i32 : i32 to index
    %c0_45 = arith.constant 0 : index
    %c0_46 = arith.constant 0 : index
    %115 = vector.load %arg5[%114, %c0_45, %c0_46] : memref<8x8x128xf32, #tpu.memory_space<vmem>>, vector<1x8x128xf32>
    %116 = vector.shape_cast %115 : vector<1x8x128xf32> to vector<8x128xf32>
    %117 = vector.shape_cast %113 : vector<8x128xf32> to vector<1x8x128xf32>
    tpu.vector_store %arg5[%114, %c0_45, %c0_46], %117 {strides = array<i32>} : memref<8x8x128xf32, #tpu.memory_space<vmem>>, vector<1x8x128xf32>,
    %c7_i32 = arith.constant 7 : i32
    %cst_47 = arith.constant dense<0.000000e+00> : vector<8x128xf32>
    %118 = tpu.matmul %113, %4, %cst_47 {dimension_numbers = #tpu.dot_dimension_numbers<[1], [0], [0], [1], [0, 0, 1, 1], [], []>} : vector<8x128xf32>, vector<128x128xf32>, vector<8x128xf32> -> vector<8x128xf32>
    %119 = arith.index_cast %c7_i32 : i32 to index
    %c0_48 = arith.constant 0 : index
    %c0_49 = arith.constant 0 : index
    %120 = vector.load %arg2[%119, %c0_48, %c0_49] : memref<8x8x128xf32, #tpu.memory_space<vmem>>, vector<1x8x128xf32>
    %121 = vector.shape_cast %120 : vector<1x8x128xf32> to vector<8x128xf32>
    %122 = arith.addf %118, %121 : vector<8x128xf32>
    %cst_50 = arith.constant 1.000000e+00 : f32
    %123 = arith.subf %cst_50, %3 : f32
    %124 = vector.broadcast %123 : f32 to vector<8x128xf32>
    %125 = arith.mulf %124, %118 : vector<8x128xf32>
    %126 = math.tanh %122 : vector<8x128xf32>
    %127 = vector.broadcast %3 : f32 to vector<8x128xf32>
    %128 = arith.mulf %127, %126 : vector<8x128xf32>
    %129 = arith.addf %125, %128 : vector<8x128xf32>
    %130 = arith.index_cast %c7_i32 : i32 to index
    %c0_51 = arith.constant 0 : index
    %c0_52 = arith.constant 0 : index
    %131 = vector.load %arg5[%130, %c0_51, %c0_52] : memref<8x8x128xf32, #tpu.memory_space<vmem>>, vector<1x8x128xf32>
    %132 = vector.shape_cast %131 : vector<1x8x128xf32> to vector<8x128xf32>
    %133 = vector.shape_cast %129 : vector<8x128xf32> to vector<1x8x128xf32>
    tpu.vector_store %arg5[%130, %c0_51, %c0_52], %133 {strides = array<i32>} : memref<8x8x128xf32, #tpu.memory_space<vmem>>, vector<1x8x128xf32>,
    %c8_i32 = arith.constant 8 : i32
    %c0_53 = arith.constant 0 : index
    %c0_54 = arith.constant 0 : index
    %134 = vector.load %arg6[%c0_53, %c0_54] : memref<8x128xf32, #tpu.memory_space<vmem>>, vector<8x128xf32>
    tpu.vector_store %arg6[%c0_53, %c0_54], %129 {strides = array<i32>} : memref<8x128xf32, #tpu.memory_space<vmem>>, vector<8x128xf32>,
    return
  }
  func.func @transform_0(%arg0: i32) -> i32 {
    %c0_i32 = arith.constant 0 : i32
    %c0_i32_0 = arith.constant 0 : i32
    return %c0_i32 : i32
  }
  func.func @transform_1(%arg0: i32) -> (i32, i32, i32) {
    %c0_i32 = arith.constant 0 : i32
    %c0_i32_0 = arith.constant 0 : i32
    %c0_i32_1 = arith.constant 0 : i32
    return %arg0, %c0_i32, %c0_i32_0 : i32, i32, i32
  }
  func.func @transform_2(%arg0: i32) -> (i32, i32) {
    %c0_i32 = arith.constant 0 : i32
    %c0_i32_0 = arith.constant 0 : i32
    %c0_i32_1 = arith.constant 0 : i32
    return %c0_i32, %c0_i32_0 : i32, i32
  }
  func.func @transform_3(%arg0: i32) -> (i32, i32) {
    %c0_i32 = arith.constant 0 : i32
    %c0_i32_0 = arith.constant 0 : i32
    %c0_i32_1 = arith.constant 0 : i32
    return %c0_i32, %c0_i32_0 : i32, i32
  }
  func.func @transform_4(%arg0: i32) -> (i32, i32, i32) {
    %c0_i32 = arith.constant 0 : i32
    %c0_i32_0 = arith.constant 0 : i32
    %c0_i32_1 = arith.constant 0 : i32
    return %arg0, %c0_i32, %c0_i32_0 : i32, i32, i32
  }
}

</mosaic_0001>

<llo_original>
// kernel: tpu_custom_call.1
$region0: #{tpu_custom_call.1}
  #allocation0 [shape = 'u32[]', space=smem, size = 0x4, offset = 0x4, fixed_abs, tag = 'smem constant byte address 0x4 - core index']
  #allocation1 [shape = 'u32[144,128]{1,0:T(1,128)}', space=vmem, size = 0x12000, scoped, tag = 'internal scratch']
  #allocation2 [shape = 'f32[8,128]{1,0:T(8,128)}', space=vmem, size = 0x1000, scoped, tag = 'scratch operand']
  #allocation3 [shape = 'f32[1]{0:T(128)S(6)}', space=smem, size = 0x200, scoped, tag = 'scoped memory for tpu_custom_call.1']
  %s0 = inlined_call_operand.<no memory space> [shape: f32[1], index: 0, kind: input, shape index: {}]
  %s1 = inlined_call_operand.hbm [shape: f32[8,8,128], index: 1, kind: input, shape index: {}]
  %s2 = inlined_call_operand.hbm [shape: f32[8,128], index: 2, kind: input, shape index: {}]
  %s3 = inlined_call_operand.hbm [shape: f32[128,128], index: 3, kind: input, shape index: {}]
  %s4 = inlined_call_operand.hbm [shape: f32[8,8,128], index: 4, kind: output, shape index: {}]
  %s5 = sld [smem:[#allocation0]]
  $region42: #{tpu_custom_call.1} parent=0
    _
  %s7 = ssub.s32 1, %s5
  %s8 = scalar_select 0, %s7, %s5
  %9 = sst [smem:[#allocation3]] %s0
  $region1: #{tpu_custom_call.1} parent=0
    #allocation4 [shape = 'u8[32768]{0}', space=vmem, size = 0x8000, scoped, tag = 'input window, operand 1, single buffered']
    #allocation5 [shape = 's32[1]{0}', space=sflag, size = 0x4, scoped, tag = 'scoped memory for tpu_custom_call.1']
    #allocation6 [shape = 's32[1]{0}', space=sflag, size = 0x4, scoped, tag = 'scoped memory for tpu_custom_call.1']
    #allocation7 [shape = 'u8[4096]{0}', space=vmem, size = 0x1000, scoped, tag = 'input window, operand 2, single buffered']
    #allocation8 [shape = 's32[1]{0}', space=sflag, size = 0x4, scoped, tag = 'scoped memory for tpu_custom_call.1']
    #allocation9 [shape = 'u8[65536]{0}', space=vmem, size = 0x10000, scoped, tag = 'input window, operand 3, single buffered']
    #allocation10 [shape = 'u8[32768]{0}', space=vmem, size = 0x8000, scoped, tag = 'output window, operand 0, single buffered']
    %10 = vsyncpa [#allocation5], 0
    %11 = vsyncpa [#allocation8], 0
    %12 = vsyncpa [#allocation6], 0
    // Predicated region
    $region2: #{tpu_custom_call.1} parent=1 // pred_check
      _
    $region3: #{tpu_custom_call.1} parent=1 // pred_check_branch
      %14 = sbr.rel (0) target = $region5
    $region4: #{tpu_custom_call.1} parent=1 // pred_region
      _
    $region5: #{tpu_custom_call.1} parent=1 // pred_fallthru
      _
    // Predicated region
    $region6: #{tpu_custom_call.1} parent=1 // pred_check
      _
    $region7: #{tpu_custom_call.1} parent=1 // pred_check_branch
      %16 = sbr.rel (0) target = $region9
    $region8: #{tpu_custom_call.1} parent=1 // pred_region
      %s18 = ssub.s32 1024, 1024
      %19 = vsyncadd [#allocation5], %s18
      %s20 = sshll.u32 [#allocation4], 4
      %s21 = int_to_ptr.vmem [resolvable:$true] %s20
      %26 = dma.hbm_to_vmem [thread:$0]  %s1, 1024, %s21, [#allocation5], 128, 128, 8
    $region9: #{tpu_custom_call.1} parent=1 // pred_fallthru
      _
    // Predicated region
    $region10: #{tpu_custom_call.1} parent=1 // pred_check
      _
    $region11: #{tpu_custom_call.1} parent=1 // pred_check_branch
      %28 = sbr.rel (0) target = $region13
    $region12: #{tpu_custom_call.1} parent=1 // pred_region
      %s30 = ssub.s32 128, 128
      %31 = vsyncadd [#allocation8], %s30
      %s33 = sshll.u32 [#allocation7], 4
      %s34 = int_to_ptr.vmem [resolvable:$true] %s33
      %36 = dma.hbm_to_vmem [thread:$0]  %s2, 128, %s34, [#allocation8]
    $region13: #{tpu_custom_call.1} parent=1 // pred_fallthru
      _
    // Predicated region
    $region14: #{tpu_custom_call.1} parent=1 // pred_check
      _
    $region15: #{tpu_custom_call.1} parent=1 // pred_check_branch
      %38 = sbr.rel (0) target = $region17
    $region16: #{tpu_custom_call.1} parent=1 // pred_region
      %s40 = ssub.s32 2048, 2048
      %41 = vsyncadd [#allocation8], %s40
      %s42 = sshll.u32 [#allocation9], 4
      %s43 = int_to_ptr.vmem [resolvable:$true] %s42
      %48 = dma.hbm_to_vmem [thread:$0]  %s3, 2048, %s43, [#allocation8], 128, 128, 8
    $region17: #{tpu_custom_call.1} parent=1 // pred_fallthru
      _
    // Predicated region
    $region18: #{tpu_custom_call.1} parent=1 // pred_check
      _
    $region19: #{tpu_custom_call.1} parent=1 // pred_check_branch
      %50 = sbr.rel (0) target = $region21
    $region20: #{tpu_custom_call.1} parent=1 // pred_region
      %51 = dma.done [#allocation5], 1024
    $region21: #{tpu_custom_call.1} parent=1 // pred_fallthru
      _
    // Predicated region
    $region22: #{tpu_custom_call.1} parent=1 // pred_check
      _
    $region23: #{tpu_custom_call.1} parent=1 // pred_check_branch
      %53 = sbr.rel (0) target = $region25
    $region24: #{tpu_custom_call.1} parent=1 // pred_region
      %54 = dma.done [#allocation8], 128
    $region25: #{tpu_custom_call.1} parent=1 // pred_fallthru
      _
    // Predicated region
    $region26: #{tpu_custom_call.1} parent=1 // pred_check
      _
    $region27: #{tpu_custom_call.1} parent=1 // pred_check_branch
      %56 = sbr.rel (0) target = $region29
    $region28: #{tpu_custom_call.1} parent=1 // pred_region
      %57 = dma.done [#allocation8], 2048
    $region29: #{tpu_custom_call.1} parent=1 // pred_fallthru
      _
    %p58 = scmp.eq.s32.totalorder 0, 0
    // Predicated region
    $region30: #{tpu_custom_call.1} parent=1 // pred_check
      %p59 = pneg %p58
    $region31: #{tpu_custom_call.1} parent=1 // pred_check_branch
      %61 = sbr.rel (%p59) target = $region33
    $region32: #{tpu_custom_call.1} parent=1 // pred_region
      %v62 = vld [vmem:[#allocation7] sm:$0xff]
      %63 = vst [vmem:[#allocation2] sm:$0xff] %v62
    $region33: #{tpu_custom_call.1} parent=1 // pred_fallthru
      _
    %s64 = sld [smem:[#allocation3]]
    %v65 = vld [vmem:[#allocation9] sm:$0xff]
    %v66 = vld [vmem:[#allocation9 + $0x8] sm:$0xff]
    %v67 = vld [vmem:[#allocation9 + $0x10] sm:$0xff]
    %v68 = vld [vmem:[#allocation9 + $0x18] sm:$0xff]
    %v69 = vld [vmem:[#allocation9 + $0x20] sm:$0xff]
    %v70 = vld [vmem:[#allocation9 + $0x28] sm:$0xff]
    %v71 = vld [vmem:[#allocation9 + $0x30] sm:$0xff]
    %v72 = vld [vmem:[#allocation9 + $0x38] sm:$0xff]
    %v73 = vld [vmem:[#allocation9 + $0x40] sm:$0xff]
    %v74 = vld [vmem:[#allocation9 + $0x48] sm:$0xff]
    %v75 = vld [vmem:[#allocation9 + $0x50] sm:$0xff]
    %v76 = vld [vmem:[#allocation9 + $0x58] sm:$0xff]
    %v77 = vld [vmem:[#allocation9 + $0x60] sm:$0xff]
    %v78 = vld [vmem:[#allocation9 + $0x68] sm:$0xff]
    %v79 = vld [vmem:[#allocation9 + $0x70] sm:$0xff]
    %v80 = vld [vmem:[#allocation9 + $0x78] sm:$0xff]
    %v81 = vld [vmem:[#allocation2] sm:$0xff]
    %82 = vmatprep.subr.mxu0 0.0
    %83 = vmatpush1.msra.mxu0 %v65
    %84 = vmatprep.subr.mxu0 0.0
    %85 = vmatpush1.msra.mxu0 %v66
    %86 = vmatprep.subr.mxu0 0.0
    %87 = vmatpush1.msra.mxu0 %v67
    %88 = vmatprep.subr.mxu0 0.0
    %89 = vmatpush1.msra.mxu0 %v68
    %90 = vmatprep.subr.mxu0 0.0
    %91 = vmatpush1.msra.mxu0 %v69
    %92 = vmatprep.subr.mxu0 0.0
    %93 = vmatpush1.msra.mxu0 %v70
    %94 = vmatprep.subr.mxu0 0.0
    %95 = vmatpush1.msra.mxu0 %v71
    %96 = vmatprep.subr.mxu0 0.0
    %97 = vmatpush1.msra.mxu0 %v72
    %98 = vmatprep.subr.mxu0 0.0
    %99 = vmatpush1.msra.mxu0 %v73
    %100 = vmatprep.subr.mxu0 0.0
    %101 = vmatpush1.msra.mxu0 %v74
    %102 = vmatprep.subr.mxu0 0.0
    %103 = vmatpush1.msra.mxu0 %v75
    %104 = vmatprep.subr.mxu0 0.0
    %105 = vmatpush1.msra.mxu0 %v76
    %106 = vmatprep.subr.mxu0 0.0
    %107 = vmatpush1.msra.mxu0 %v77
    %108 = vmatprep.subr.mxu0 0.0
    %109 = vmatpush1.msra.mxu0 %v78
    %110 = vmatprep.subr.mxu0 0.0
    %111 = vmatpush1.msra.mxu0 %v79
    %112 = vmatprep.subr.mxu0 0.0
    %113 = vmatpush1.msra.mxu0 %v80
    %114 = vmatprep.subr.mxu0 0.0
    %115 = vmatpush1.msra.mxu0 0.0
    %116 = vmatprep.subr.mxu0 0.0
    %117 = vmatpush1.msra.mxu0 0.0
    %118 = vmatprep.subr.mxu0 0.0
    %119 = vmatpush1.msra.mxu0 0.0
    %120 = vmatprep.subr.mxu0 0.0
    %121 = vmatpush1.msra.mxu0 0.0
    %122 = vmatprep.subr.mxu0 0.0
    %123 = vmatpush1.msra.mxu0 0.0
    %124 = vmatprep.subr.mxu0 0.0
    %125 = vmatpush1.msra.mxu0 0.0
    %126 = vmatprep.subr.mxu0 0.0
    %127 = vmatpush1.msra.mxu0 0.0
    %128 = vmatprep.subr.mxu0 0.0
    %129 = vmatpush1.msra.mxu0 0.0
    %130 = vmatprep.subr.mxu0 0.0
    %131 = vmatpush1.msra.mxu0 0.0
    %132 = vmatprep.subr.mxu0 0.0
    %133 = vmatpush1.msra.mxu0 0.0
    %134 = vmatprep.subr.mxu0 0.0
    %135 = vmatpush1.msra.mxu0 0.0
    %136 = vmatprep.subr.mxu0 0.0
    %137 = vmatpush1.msra.mxu0 0.0
    %138 = vmatprep.subr.mxu0 0.0
    %139 = vmatpush1.msra.mxu0 0.0
    %140 = vmatprep.subr.mxu0 0.0
    %141 = vmatpush1.msra.mxu0 0.0
    %142 = vmatprep.subr.mxu0 0.0
    %143 = vmatpush1.msra.mxu0 0.0
    %144 = vmatprep.subr.mxu0 0.0
    %145 = vmatpush1.msra.mxu0 0.0
    %146 = vmatprep.mubr.f32.mxu0 0.0
    %147 = vmatmul.mubr.f32.gmra.mrb[0].mxu0 %v81
    %v148 = vpop.f32.mrb[0].mxu0
    %v149 = vadd.f32 0.0, %v148
    %v150 = vpop.f32.mrb[0].mxu0
    %151 = vdwg.mxu0
    %v152 = vld [vmem:[#allocation4] sm:$0xff]
    %v153 = vadd.f32 %v149, %v152
    %s154 = ssub.f32 1.0, %s64
    %v155 = vstv %s154
    %v156 = vmul.f32 %v155, %v149
    %v157 = vtanh.pop %v153
    %v158 = vstv %s64
    %v159 = vmul.f32 %v158, %v157
    %v160 = vadd.f32 %v156, %v159
    %161 = vst [vmem:[#allocation10] sm:$0xff] %v160
    %162 = vmatprep.subr.mxu0 0.0
    %163 = vmatpush1.msra.mxu0 %v65
    %164 = vmatprep.subr.mxu0 0.0
    %165 = vmatpush1.msra.mxu0 %v66
    %166 = vmatprep.subr.mxu0 0.0
    %167 = vmatpush1.msra.mxu0 %v67
    %168 = vmatprep.subr.mxu0 0.0
    %169 = vmatpush1.msra.mxu0 %v68
    %170 = vmatprep.subr.mxu0 0.0
    %171 = vmatpush1.msra.mxu0 %v69
    %172 = vmatprep.subr.mxu0 0.0
    %173 = vmatpush1.msra.mxu0 %v70
    %174 = vmatprep.subr.mxu0 0.0
    %175 = vmatpush1.msra.mxu0 %v71
    %176 = vmatprep.subr.mxu0 0.0
    %177 = vmatpush1.msra.mxu0 %v72
    %178 = vmatprep.subr.mxu0 0.0
    %179 = vmatpush1.msra.mxu0 %v73
    %180 = vmatprep.subr.mxu0 0.0
    %181 = vmatpush1.msra.mxu0 %v74
    %182 = vmatprep.subr.mxu0 0.0
    %183 = vmatpush1.msra.mxu0 %v75
    %184 = vmatprep.subr.mxu0 0.0
    %185 = vmatpush1.msra.mxu0 %v76
    %186 = vmatprep.subr.mxu0 0.0
    %187 = vmatpush1.msra.mxu0 %v77
    %188 = vmatprep.subr.mxu0 0.0
    %189 = vmatpush1.msra.mxu0 %v78
    %190 = vmatprep.subr.mxu0 0.0
    %191 = vmatpush1.msra.mxu0 %v79
    %192 = vmatprep.subr.mxu0 0.0
    %193 = vmatpush1.msra.mxu0 %v80
    %194 = vmatprep.subr.mxu0 0.0
    %195 = vmatpush1.msra.mxu0 0.0
    %196 = vmatprep.subr.mxu0 0.0
    %197 = vmatpush1.msra.mxu0 0.0
    %198 = vmatprep.subr.mxu0 0.0
    %199 = vmatpush1.msra.mxu0 0.0
    %200 = vmatprep.subr.mxu0 0.0
    %201 = vmatpush1.msra.mxu0 0.0
    %202 = vmatprep.subr.mxu0 0.0
    %203 = vmatpush1.msra.mxu0 0.0
    %204 = vmatprep.subr.mxu0 0.0
    %205 = vmatpush1.msra.mxu0 0.0
    %206 = vmatprep.subr.mxu0 0.0
    %207 = vmatpush1.msra.mxu0 0.0
    %208 = vmatprep.subr.mxu0 0.0
    %209 = vmatpush1.msra.mxu0 0.0
    %210 = vmatprep.subr.mxu0 0.0
    %211 = vmatpush1.msra.mxu0 0.0
    %212 = vmatprep.subr.mxu0 0.0
    %213 = vmatpush1.msra.mxu0 0.0
    %214 = vmatprep.subr.mxu0 0.0
    %215 = vmatpush1.msra.mxu0 0.0
    %216 = vmatprep.subr.mxu0 0.0
    %217 = vmatpush1.msra.mxu0 0.0
    %218 = vmatprep.subr.mxu0 0.0
    %219 = vmatpush1.msra.mxu0 0.0
    %220 = vmatprep.subr.mxu0 0.0
    %221 = vmatpush1.msra.mxu0 0.0
    %222 = vmatprep.subr.mxu0 0.0
    %223 = vmatpush1.msra.mxu0 0.0
    %224 = vmatprep.subr.mxu0 0.0
    %225 = vmatpush1.msra.mxu0 0.0
    %226 = vmatprep.mubr.f32.mxu0 0.0
    %227 = vmatmul.mubr.f32.gmra.mrb[0].mxu0 %v160
    %v228 = vpop.f32.mrb[0].mxu0
    %v229 = vadd.f32 0.0, %v228
    %v230 = vpop.f32.mrb[0].mxu0
    %231 = vdwg.mxu0
    %s232 = scalar_lea.vmem [#allocation4], 8
    %v233 = vld [vmem:[%s232] sm:$0xff]
    %v234 = vadd.f32 %v229, %v233
    %v235 = vmul.f32 %v155, %v229
    %v236 = vtanh.pop %v234
    %v237 = vmul.f32 %v158, %v236
    %v238 = vadd.f32 %v235, %v237
    %s239 = scalar_lea.vmem [#allocation10], 8
    %240 = vst [vmem:[%s239] sm:$0xff] %v238
    %241 = vmatprep.subr.mxu0 0.0
    %242 = vmatpush1.msra.mxu0 %v65
    %243 = vmatprep.subr.mxu0 0.0
    %244 = vmatpush1.msra.mxu0 %v66
    %245 = vmatprep.subr.mxu0 0.0
    %246 = vmatpush1.msra.mxu0 %v67
    %247 = vmatprep.subr.mxu0 0.0
    %248 = vmatpush1.msra.mxu0 %v68
    %249 = vmatprep.subr.mxu0 0.0
    %250 = vmatpush1.msra.mxu0 %v69
    %251 = vmatprep.subr.mxu0 0.0
    %252 = vmatpush1.msra.mxu0 %v70
    %253 = vmatprep.subr.mxu0 0.0
    %254 = vmatpush1.msra.mxu0 %v71
    %255 = vmatprep.subr.mxu0 0.0
    %256 = vmatpush1.msra.mxu0 %v72
    %257 = vmatprep.subr.mxu0 0.0
    %258 = vmatpush1.msra.mxu0 %v73
    %259 = vmatprep.subr.mxu0 0.0
    %260 = vmatpush1.msra.mxu0 %v74
    %261 = vmatprep.subr.mxu0 0.0
    %262 = vmatpush1.msra.mxu0 %v75
    %263 = vmatprep.subr.mxu0 0.0
    %264 = vmatpush1.msra.mxu0 %v76
    %265 = vmatprep.subr.mxu0 0.0
    %266 = vmatpush1.msra.mxu0 %v77
    %267 = vmatprep.subr.mxu0 0.0
    %268 = vmatpush1.msra.mxu0 %v78
    %269 = vmatprep.subr.mxu0 0.0
    %270 = vmatpush1.msra.mxu0 %v79
    %271 = vmatprep.subr.mxu0 0.0
    %272 = vmatpush1.msra.mxu0 %v80
    %273 = vmatprep.subr.mxu0 0.0
    %274 = vmatpush1.msra.mxu0 0.0
    %275 = vmatprep.subr.mxu0 0.0
    %276 = vmatpush1.msra.mxu0 0.0
    %277 = vmatprep.subr.mxu0 0.0
    %278 = vmatpush1.msra.mxu0 0.0
    %279 = vmatprep.subr.mxu0 0.0
    %280 = vmatpush1.msra.mxu0 0.0
    %281 = vmatprep.subr.mxu0 0.0
    %282 = vmatpush1.msra.mxu0 0.0
    %283 = vmatprep.subr.mxu0 0.0
    %284 = vmatpush1.msra.mxu0 0.0
    %285 = vmatprep.subr.mxu0 0.0
    %286 = vmatpush1.msra.mxu0 0.0
    %287 = vmatprep.subr.mxu0 0.0
    %288 = vmatpush1.msra.mxu0 0.0
    %289 = vmatprep.subr.mxu0 0.0
    %290 = vmatpush1.msra.mxu0 0.0
    %291 = vmatprep.subr.mxu0 0.0
    %292 = vmatpush1.msra.mxu0 0.0
    %293 = vmatprep.subr.mxu0 0.0
    %294 = vmatpush1.msra.mxu0 0.0
    %295 = vmatprep.subr.mxu0 0.0
    %296 = vmatpush1.msra.mxu0 0.0
    %297 = vmatprep.subr.mxu0 0.0
    %298 = vmatpush1.msra.mxu0 0.0
    %299 = vmatprep.subr.mxu0 0.0
    %300 = vmatpush1.msra.mxu0 0.0
    %301 = vmatprep.subr.mxu0 0.0
    %302 = vmatpush1.msra.mxu0 0.0
    %303 = vmatprep.subr.mxu0 0.0
    %304 = vmatpush1.msra.mxu0 0.0
    %305 = vmatprep.mubr.f32.mxu0 0.0
    %306 = vmatmul.mubr.f32.gmra.mrb[0].mxu0 %v238
    %v307 = vpop.f32.mrb[0].mxu0
    %v308 = vadd.f32 0.0, %v307
    %v309 = vpop.f32.mrb[0].mxu0
    %310 = vdwg.mxu0
    %s311 = scalar_lea.vmem [#allocation4], 16
    %v312 = vld [vmem:[%s311] sm:$0xff]
    %v313 = vadd.f32 %v308, %v312
    %v314 = vmul.f32 %v155, %v308
    %v315 = vtanh.pop %v313
    %v316 = vmul.f32 %v158, %v315
    %v317 = vadd.f32 %v314, %v316
    %s318 = scalar_lea.vmem [#allocation10], 16
    %319 = vst [vmem:[%s318] sm:$0xff] %v317
    %320 = vmatprep.subr.mxu0 0.0
    %321 = vmatpush1.msra.mxu0 %v65
    %322 = vmatprep.subr.mxu0 0.0
    %323 = vmatpush1.msra.mxu0 %v66
    %324 = vmatprep.subr.mxu0 0.0
    %325 = vmatpush1.msra.mxu0 %v67
    %326 = vmatprep.subr.mxu0 0.0
    %327 = vmatpush1.msra.mxu0 %v68
    %328 = vmatprep.subr.mxu0 0.0
    %329 = vmatpush1.msra.mxu0 %v69
    %330 = vmatprep.subr.mxu0 0.0
    %331 = vmatpush1.msra.mxu0 %v70
    %332 = vmatprep.subr.mxu0 0.0
    %333 = vmatpush1.msra.mxu0 %v71
    %334 = vmatprep.subr.mxu0 0.0
    %335 = vmatpush1.msra.mxu0 %v72
    %336 = vmatprep.subr.mxu0 0.0
    %337 = vmatpush1.msra.mxu0 %v73
    %338 = vmatprep.subr.mxu0 0.0
    %339 = vmatpush1.msra.mxu0 %v74
    %340 = vmatprep.subr.mxu0 0.0
    %341 = vmatpush1.msra.mxu0 %v75
    %342 = vmatprep.subr.mxu0 0.0
    %343 = vmatpush1.msra.mxu0 %v76
    %344 = vmatprep.subr.mxu0 0.0
    %345 = vmatpush1.msra.mxu0 %v77
    %346 = vmatprep.subr.mxu0 0.0
    %347 = vmatpush1.msra.mxu0 %v78
    %348 = vmatprep.subr.mxu0 0.0
    %349 = vmatpush1.msra.mxu0 %v79
    %350 = vmatprep.subr.mxu0 0.0
    %351 = vmatpush1.msra.mxu0 %v80
    %352 = vmatprep.subr.mxu0 0.0
    %353 = vmatpush1.msra.mxu0 0.0
    %354 = vmatprep.subr.mxu0 0.0
    %355 = vmatpush1.msra.mxu0 0.0
    %356 = vmatprep.subr.mxu0 0.0
    %357 = vmatpush1.msra.mxu0 0.0
    %358 = vmatprep.subr.mxu0 0.0
    %359 = vmatpush1.msra.mxu0 0.0
    %360 = vmatprep.subr.mxu0 0.0
    %361 = vmatpush1.msra.mxu0 0.0
    %362 = vmatprep.subr.mxu0 0.0
    %363 = vmatpush1.msra.mxu0 0.0
    %364 = vmatprep.subr.mxu0 0.0
    %365 = vmatpush1.msra.mxu0 0.0
    %366 = vmatprep.subr.mxu0 0.0
    %367 = vmatpush1.msra.mxu0 0.0
    %368 = vmatprep.subr.mxu0 0.0
    %369 = vmatpush1.msra.mxu0 0.0
    %370 = vmatprep.subr.mxu0 0.0
    %371 = vmatpush1.msra.mxu0 0.0
    %372 = vmatprep.subr.mxu0 0.0
    %373 = vmatpush1.msra.mxu0 0.0
    %374 = vmatprep.subr.mxu0 0.0
    %375 = vmatpush1.msra.mxu0 0.0
    %376 = vmatprep.subr.mxu0 0.0
    %377 = vmatpush1.msra.mxu0 0.0
    %378 = vmatprep.subr.mxu0 0.0
    %379 = vmatpush1.msra.mxu0 0.0
    %380 = vmatprep.subr.mxu0 0.0
    %381 = vmatpush1.msra.mxu0 0.0
    %382 = vmatprep.subr.mxu0 0.0
    %383 = vmatpush1.msra.mxu0 0.0
    %384 = vmatprep.mubr.f32.mxu0 0.0
    %385 = vmatmul.mubr.f32.gmra.mrb[0].mxu0 %v317
    %v386 = vpop.f32.mrb[0].mxu0
    %v387 = vadd.f32 0.0, %v386
    %v388 = vpop.f32.mrb[0].mxu0
    %389 = vdwg.mxu0
    %s390 = scalar_lea.vmem [#allocation4], 24
    %v391 = vld [vmem:[%s390] sm:$0xff]
    %v392 = vadd.f32 %v387, %v391
    %v393 = vmul.f32 %v155, %v387
    %v394 = vtanh.pop %v392
    %v395 = vmul.f32 %v158, %v394
    %v396 = vadd.f32 %v393, %v395
    %s397 = scalar_lea.vmem [#allocation10], 24
    %398 = vst [vmem:[%s397] sm:$0xff] %v396
    %399 = vmatprep.subr.mxu0 0.0
    %400 = vmatpush1.msra.mxu0 %v65
    %401 = vmatprep.subr.mxu0 0.0
    %402 = vmatpush1.msra.mxu0 %v66
    %403 = vmatprep.subr.mxu0 0.0
    %404 = vmatpush1.msra.mxu0 %v67
    %405 = vmatprep.subr.mxu0 0.0
    %406 = vmatpush1.msra.mxu0 %v68
    %407 = vmatprep.subr.mxu0 0.0
    %408 = vmatpush1.msra.mxu0 %v69
    %409 = vmatprep.subr.mxu0 0.0
    %410 = vmatpush1.msra.mxu0 %v70
    %411 = vmatprep.subr.mxu0 0.0
    %412 = vmatpush1.msra.mxu0 %v71
    %413 = vmatprep.subr.mxu0 0.0
    %414 = vmatpush1.msra.mxu0 %v72
    %415 = vmatprep.subr.mxu0 0.0
    %416 = vmatpush1.msra.mxu0 %v73
    %417 = vmatprep.subr.mxu0 0.0
    %418 = vmatpush1.msra.mxu0 %v74
    %419 = vmatprep.subr.mxu0 0.0
    %420 = vmatpush1.msra.mxu0 %v75
    %421 = vmatprep.subr.mxu0 0.0
    %422 = vmatpush1.msra.mxu0 %v76
    %423 = vmatprep.subr.mxu0 0.0
    %424 = vmatpush1.msra.mxu0 %v77
    %425 = vmatprep.subr.mxu0 0.0
    %426 = vmatpush1.msra.mxu0 %v78
    %427 = vmatprep.subr.mxu0 0.0
    %428 = vmatpush1.msra.mxu0 %v79
    %429 = vmatprep.subr.mxu0 0.0
    %430 = vmatpush1.msra.mxu0 %v80
    %431 = vmatprep.subr.mxu0 0.0
    %432 = vmatpush1.msra.mxu0 0.0
    %433 = vmatprep.subr.mxu0 0.0
    %434 = vmatpush1.msra.mxu0 0.0
    %435 = vmatprep.subr.mxu0 0.0
    %436 = vmatpush1.msra.mxu0 0.0
    %437 = vmatprep.subr.mxu0 0.0
    %438 = vmatpush1.msra.mxu0 0.0
    %439 = vmatprep.subr.mxu0 0.0
    %440 = vmatpush1.msra.mxu0 0.0
    %441 = vmatprep.subr.mxu0 0.0
    %442 = vmatpush1.msra.mxu0 0.0
    %443 = vmatprep.subr.mxu0 0.0
    %444 = vmatpush1.msra.mxu0 0.0
    %445 = vmatprep.subr.mxu0 0.0
    %446 = vmatpush1.msra.mxu0 0.0
    %447 = vmatprep.subr.mxu0 0.0
    %448 = vmatpush1.msra.mxu0 0.0
    %449 = vmatprep.subr.mxu0 0.0
    %450 = vmatpush1.msra.mxu0 0.0
    %451 = vmatprep.subr.mxu0 0.0
    %452 = vmatpush1.msra.mxu0 0.0
    %453 = vmatprep.subr.mxu0 0.0
    %454 = vmatpush1.msra.mxu0 0.0
    %455 = vmatprep.subr.mxu0 0.0
    %456 = vmatpush1.msra.mxu0 0.0
    %457 = vmatprep.subr.mxu0 0.0
    %458 = vmatpush1.msra.mxu0 0.0
    %459 = vmatprep.subr.mxu0 0.0
    %460 = vmatpush1.msra.mxu0 0.0
    %461 = vmatprep.subr.mxu0 0.0
    %462 = vmatpush1.msra.mxu0 0.0
    %463 = vmatprep.mubr.f32.mxu0 0.0
    %464 = vmatmul.mubr.f32.gmra.mrb[0].mxu0 %v396
    %v465 = vpop.f32.mrb[0].mxu0
    %v466 = vadd.f32 0.0, %v465
    %v467 = vpop.f32.mrb[0].mxu0
    %468 = vdwg.mxu0
    %s469 = scalar_lea.vmem [#allocation4], 32
    %v470 = vld [vmem:[%s469] sm:$0xff]
    %v471 = vadd.f32 %v466, %v470
    %v472 = vmul.f32 %v155, %v466
    %v473 = vtanh.pop %v471
    %v474 = vmul.f32 %v158, %v473
    %v475 = vadd.f32 %v472, %v474
    %s476 = scalar_lea.vmem [#allocation10], 32
    %477 = vst [vmem:[%s476] sm:$0xff] %v475
    %478 = vmatprep.subr.mxu0 0.0
    %479 = vmatpush1.msra.mxu0 %v65
    %480 = vmatprep.subr.mxu0 0.0
    %481 = vmatpush1.msra.mxu0 %v66
    %482 = vmatprep.subr.mxu0 0.0
    %483 = vmatpush1.msra.mxu0 %v67
    %484 = vmatprep.subr.mxu0 0.0
    %485 = vmatpush1.msra.mxu0 %v68
    %486 = vmatprep.subr.mxu0 0.0
    %487 = vmatpush1.msra.mxu0 %v69
    %488 = vmatprep.subr.mxu0 0.0
    %489 = vmatpush1.msra.mxu0 %v70
    %490 = vmatprep.subr.mxu0 0.0
    %491 = vmatpush1.msra.mxu0 %v71
    %492 = vmatprep.subr.mxu0 0.0
    %493 = vmatpush1.msra.mxu0 %v72
    %494 = vmatprep.subr.mxu0 0.0
    %495 = vmatpush1.msra.mxu0 %v73
    %496 = vmatprep.subr.mxu0 0.0
    %497 = vmatpush1.msra.mxu0 %v74
    %498 = vmatprep.subr.mxu0 0.0
    %499 = vmatpush1.msra.mxu0 %v75
    %500 = vmatprep.subr.mxu0 0.0
    %501 = vmatpush1.msra.mxu0 %v76
    %502 = vmatprep.subr.mxu0 0.0
    %503 = vmatpush1.msra.mxu0 %v77
    %504 = vmatprep.subr.mxu0 0.0
    %505 = vmatpush1.msra.mxu0 %v78
    %506 = vmatprep.subr.mxu0 0.0
    %507 = vmatpush1.msra.mxu0 %v79
    %508 = vmatprep.subr.mxu0 0.0
    %509 = vmatpush1.msra.mxu0 %v80
    %510 = vmatprep.subr.mxu0 0.0
    %511 = vmatpush1.msra.mxu0 0.0
    %512 = vmatprep.subr.mxu0 0.0
    %513 = vmatpush1.msra.mxu0 0.0
    %514 = vmatprep.subr.mxu0 0.0
    %515 = vmatpush1.msra.mxu0 0.0
    %516 = vmatprep.subr.mxu0 0.0
    %517 = vmatpush1.msra.mxu0 0.0
    %518 = vmatprep.subr.mxu0 0.0
    %519 = vmatpush1.msra.mxu0 0.0
    %520 = vmatprep.subr.mxu0 0.0
    %521 = vmatpush1.msra.mxu0 0.0
    %522 = vmatprep.subr.mxu0 0.0
    %523 = vmatpush1.msra.mxu0 0.0
    %524 = vmatprep.subr.mxu0 0.0
    %525 = vmatpush1.msra.mxu0 0.0
    %526 = vmatprep.subr.mxu0 0.0
    %527 = vmatpush1.msra.mxu0 0.0
    %528 = vmatprep.subr.mxu0 0.0
    %529 = vmatpush1.msra.mxu0 0.0
    %530 = vmatprep.subr.mxu0 0.0
    %531 = vmatpush1.msra.mxu0 0.0
    %532 = vmatprep.subr.mxu0 0.0
    %533 = vmatpush1.msra.mxu0 0.0
    %534 = vmatprep.subr.mxu0 0.0
    %535 = vmatpush1.msra.mxu0 0.0
    %536 = vmatprep.subr.mxu0 0.0
    %537 = vmatpush1.msra.mxu0 0.0
    %538 = vmatprep.subr.mxu0 0.0
    %539 = vmatpush1.msra.mxu0 0.0
    %540 = vmatprep.subr.mxu0 0.0
    %541 = vmatpush1.msra.mxu0 0.0
    %542 = vmatprep.mubr.f32.mxu0 0.0
    %543 = vmatmul.mubr.f32.gmra.mrb[0].mxu0 %v475
    %v544 = vpop.f32.mrb[0].mxu0
    %v545 = vadd.f32 0.0, %v544
    %v546 = vpop.f32.mrb[0].mxu0
    %547 = vdwg.mxu0
    %s548 = scalar_lea.vmem [#allocation4], 40
    %v549 = vld [vmem:[%s548] sm:$0xff]
    %v550 = vadd.f32 %v545, %v549
    %v551 = vmul.f32 %v155, %v545
    %v552 = vtanh.pop %v550
    %v553 = vmul.f32 %v158, %v552
    %v554 = vadd.f32 %v551, %v553
    %s555 = scalar_lea.vmem [#allocation10], 40
    %556 = vst [vmem:[%s555] sm:$0xff] %v554
    %557 = vmatprep.subr.mxu0 0.0
    %558 = vmatpush1.msra.mxu0 %v65
    %559 = vmatprep.subr.mxu0 0.0
    %560 = vmatpush1.msra.mxu0 %v66
    %561 = vmatprep.subr.mxu0 0.0
    %562 = vmatpush1.msra.mxu0 %v67
    %563 = vmatprep.subr.mxu0 0.0
    %564 = vmatpush1.msra.mxu0 %v68
    %565 = vmatprep.subr.mxu0 0.0
    %566 = vmatpush1.msra.mxu0 %v69
    %567 = vmatprep.subr.mxu0 0.0
    %568 = vmatpush1.msra.mxu0 %v70
    %569 = vmatprep.subr.mxu0 0.0
    %570 = vmatpush1.msra.mxu0 %v71
    %571 = vmatprep.subr.mxu0 0.0
    %572 = vmatpush1.msra.mxu0 %v72
    %573 = vmatprep.subr.mxu0 0.0
    %574 = vmatpush1.msra.mxu0 %v73
    %575 = vmatprep.subr.mxu0 0.0
    %576 = vmatpush1.msra.mxu0 %v74
    %577 = vmatprep.subr.mxu0 0.0
    %578 = vmatpush1.msra.mxu0 %v75
    %579 = vmatprep.subr.mxu0 0.0
    %580 = vmatpush1.msra.mxu0 %v76
    %581 = vmatprep.subr.mxu0 0.0
    %582 = vmatpush1.msra.mxu0 %v77
    %583 = vmatprep.subr.mxu0 0.0
    %584 = vmatpush1.msra.mxu0 %v78
    %585 = vmatprep.subr.mxu0 0.0
    %586 = vmatpush1.msra.mxu0 %v79
    %587 = vmatprep.subr.mxu0 0.0
    %588 = vmatpush1.msra.mxu0 %v80
    %589 = vmatprep.subr.mxu0 0.0
    %590 = vmatpush1.msra.mxu0 0.0
    %591 = vmatprep.subr.mxu0 0.0
    %592 = vmatpush1.msra.mxu0 0.0
    %593 = vmatprep.subr.mxu0 0.0
    %594 = vmatpush1.msra.mxu0 0.0
    %595 = vmatprep.subr.mxu0 0.0
    %596 = vmatpush1.msra.mxu0 0.0
    %597 = vmatprep.subr.mxu0 0.0
    %598 = vmatpush1.msra.mxu0 0.0
    %599 = vmatprep.subr.mxu0 0.0
    %600 = vmatpush1.msra.mxu0 0.0
    %601 = vmatprep.subr.mxu0 0.0
    %602 = vmatpush1.msra.mxu0 0.0
    %603 = vmatprep.subr.mxu0 0.0
    %604 = vmatpush1.msra.mxu0 0.0
    %605 = vmatprep.subr.mxu0 0.0
    %606 = vmatpush1.msra.mxu0 0.0
    %607 = vmatprep.subr.mxu0 0.0
    %608 = vmatpush1.msra.mxu0 0.0
    %609 = vmatprep.subr.mxu0 0.0
    %610 = vmatpush1.msra.mxu0 0.0
    %611 = vmatprep.subr.mxu0 0.0
    %612 = vmatpush1.msra.mxu0 0.0
    %613 = vmatprep.subr.mxu0 0.0
    %614 = vmatpush1.msra.mxu0 0.0
    %615 = vmatprep.subr.mxu0 0.0
    %616 = vmatpush1.msra.mxu0 0.0
    %617 = vmatprep.subr.mxu0 0.0
    %618 = vmatpush1.msra.mxu0 0.0
    %619 = vmatprep.subr.mxu0 0.0
    %620 = vmatpush1.msra.mxu0 0.0
    %621 = vmatprep.mubr.f32.mxu0 0.0
    %622 = vmatmul.mubr.f32.gmra.mrb[0].mxu0 %v554
    %v623 = vpop.f32.mrb[0].mxu0
    %v624 = vadd.f32 0.0, %v623
    %v625 = vpop.f32.mrb[0].mxu0
    %626 = vdwg.mxu0
    %s627 = scalar_lea.vmem [#allocation4], 48
    %v628 = vld [vmem:[%s627] sm:$0xff]
    %v629 = vadd.f32 %v624, %v628
    %v630 = vmul.f32 %v155, %v624
    %v631 = vtanh.pop %v629
    %v632 = vmul.f32 %v158, %v631
    %v633 = vadd.f32 %v630, %v632
    %s634 = scalar_lea.vmem [#allocation10], 48
    %635 = vst [vmem:[%s634] sm:$0xff] %v633
    %636 = vmatprep.subr.mxu0 0.0
    %637 = vmatpush1.msra.mxu0 %v65
    %638 = vmatprep.subr.mxu0 0.0
    %639 = vmatpush1.msra.mxu0 %v66
    %640 = vmatprep.subr.mxu0 0.0
    %641 = vmatpush1.msra.mxu0 %v67
    %642 = vmatprep.subr.mxu0 0.0
    %643 = vmatpush1.msra.mxu0 %v68
    %644 = vmatprep.subr.mxu0 0.0
    %645 = vmatpush1.msra.mxu0 %v69
    %646 = vmatprep.subr.mxu0 0.0
    %647 = vmatpush1.msra.mxu0 %v70
    %648 = vmatprep.subr.mxu0 0.0
    %649 = vmatpush1.msra.mxu0 %v71
    %650 = vmatprep.subr.mxu0 0.0
    %651 = vmatpush1.msra.mxu0 %v72
    %652 = vmatprep.subr.mxu0 0.0
    %653 = vmatpush1.msra.mxu0 %v73
    %654 = vmatprep.subr.mxu0 0.0
    %655 = vmatpush1.msra.mxu0 %v74
    %656 = vmatprep.subr.mxu0 0.0
    %657 = vmatpush1.msra.mxu0 %v75
    %658 = vmatprep.subr.mxu0 0.0
    %659 = vmatpush1.msra.mxu0 %v76
    %660 = vmatprep.subr.mxu0 0.0
    %661 = vmatpush1.msra.mxu0 %v77
    %662 = vmatprep.subr.mxu0 0.0
    %663 = vmatpush1.msra.mxu0 %v78
    %664 = vmatprep.subr.mxu0 0.0
    %665 = vmatpush1.msra.mxu0 %v79
    %666 = vmatprep.subr.mxu0 0.0
    %667 = vmatpush1.msra.mxu0 %v80
    %668 = vmatprep.subr.mxu0 0.0
    %669 = vmatpush1.msra.mxu0 0.0
    %670 = vmatprep.subr.mxu0 0.0
    %671 = vmatpush1.msra.mxu0 0.0
    %672 = vmatprep.subr.mxu0 0.0
    %673 = vmatpush1.msra.mxu0 0.0
    %674 = vmatprep.subr.mxu0 0.0
    %675 = vmatpush1.msra.mxu0 0.0
    %676 = vmatprep.subr.mxu0 0.0
    %677 = vmatpush1.msra.mxu0 0.0
    %678 = vmatprep.subr.mxu0 0.0
    %679 = vmatpush1.msra.mxu0 0.0
    %680 = vmatprep.subr.mxu0 0.0
    %681 = vmatpush1.msra.mxu0 0.0
    %682 = vmatprep.subr.mxu0 0.0
    %683 = vmatpush1.msra.mxu0 0.0
    %684 = vmatprep.subr.mxu0 0.0
    %685 = vmatpush1.msra.mxu0 0.0
    %686 = vmatprep.subr.mxu0 0.0
    %687 = vmatpush1.msra.mxu0 0.0
    %688 = vmatprep.subr.mxu0 0.0
    %689 = vmatpush1.msra.mxu0 0.0
    %690 = vmatprep.subr.mxu0 0.0
    %691 = vmatpush1.msra.mxu0 0.0
    %692 = vmatprep.subr.mxu0 0.0
    %693 = vmatpush1.msra.mxu0 0.0
    %694 = vmatprep.subr.mxu0 0.0
    %695 = vmatpush1.msra.mxu0 0.0
    %696 = vmatprep.subr.mxu0 0.0
    %697 = vmatpush1.msra.mxu0 0.0
    %698 = vmatprep.subr.mxu0 0.0
    %699 = vmatpush1.msra.mxu0 0.0
    %700 = vmatprep.mubr.f32.mxu0 0.0
    %701 = vmatmul.mubr.f32.gmra.mrb[0].mxu0 %v633
    %v702 = vpop.f32.mrb[0].mxu0
    %v703 = vadd.f32 0.0, %v702
    %v704 = vpop.f32.mrb[0].mxu0
    %705 = vdwg.mxu0
    %s706 = scalar_lea.vmem [#allocation4], 56
    %v707 = vld [vmem:[%s706] sm:$0xff]
    %v708 = vadd.f32 %v703, %v707
    %v709 = vmul.f32 %v155, %v703
    %v710 = vtanh.pop %v708
    %v711 = vmul.f32 %v158, %v710
    %v712 = vadd.f32 %v709, %v711
    %s713 = scalar_lea.vmem [#allocation10], 56
    %714 = vst [vmem:[%s713] sm:$0xff] %v712
    %715 = vst [vmem:[#allocation2] sm:$0xff] %v712
    // Predicated region
    $region34: #{tpu_custom_call.1} parent=1 // pred_check
      _
    $region35: #{tpu_custom_call.1} parent=1 // pred_check_branch
      %717 = sbr.rel (0) target = $region37
    $region36: #{tpu_custom_call.1} parent=1 // pred_region
      %s719 = ssub.s32 1024, 1024
      %720 = vsyncadd [#allocation6], %s719
      %s721 = sshll.u32 [#allocation10], 4
      %s722 = int_to_ptr.vmem [resolvable:$true] %s721
      %727 = dma.vmem_to_hbm [thread:$0]  %s722, 1024, %s4, [#allocation6], 128, 128, 8
    $region37: #{tpu_custom_call.1} parent=1 // pred_fallthru
      _
    // Predicated region
    $region38: #{tpu_custom_call.1} parent=1 // pred_check
      _
    $region39: #{tpu_custom_call.1} parent=1 // pred_check_branch
      %729 = sbr.rel (0) target = $region41
    $region40: #{tpu_custom_call.1} parent=1 // pred_region
      %730 = dma.done [#allocation6], 1024
    $region41: #{tpu_custom_call.1} parent=1 // pred_fallthru
      _
    %731 = vsyncpa [#allocation5], 1
    %732 = vsyncpa [#allocation8], 1
    %733 = vsyncpa [#allocation6], 1

</llo_original>
